<compile_context>
chip_gen: v6e
topology: v6e:2x2x1
jax: 0.10.0
libtpu: 0.0.40
codegen_flags: <defaults>
</compile_context>

<pallas_src>
import jax
import jax.numpy as jnp
from jax import lax
from jax.experimental import pallas as pl
from jax.experimental.pallas import tpu as pltpu

IN_FEATURES = 1     # predictors = ['elapsed']
HIDDEN = 32
OUT_FEATURES = 3    # targets = ['packets_input', 'packets_output', 'packets_dropped']

CHUNK_B = 512              # in-register sub-chunk: h = (32, 512) f32 = 16 vregs
MAX_TILE_B = 32768         # rows per grid step (x+out ~= 0.5 MiB HBM per step)
MIN_GRID_STEPS = 4         # keep >= 4 steps: v7x 2-TC sharding + DMA/compute overlap
SMALL_BATCH_FALLBACK = 8192  # below this, plain fused XLA beats pallas_call overhead


def _round_up(n, m):
    return ((n + m - 1) // m) * m


def _choose_tiling(B):
    """Returns (tile_b, chunk_b, b_pad). tile_b % chunk_b == 0, tile_b % 128 == 0."""
    b128 = _round_up(B, 128)
    if b128 <= CHUNK_B:
        # Tiny batch: one 128-aligned tile, chunk == tile.
        return b128, b128, b128
    # Large batch: largest chunk-aligned tile <= MAX_TILE_B that keeps at least
    # MIN_GRID_STEPS steps; padding waste stays small because the tile tracks
    # ceil(B / steps) instead of a fixed huge value.
    steps = max(MIN_GRID_STEPS, pl.cdiv(b128, MAX_TILE_B))
    tile_b = min(MAX_TILE_B, _round_up(pl.cdiv(b128, steps), CHUNK_B))
    b_pad = _round_up(B, tile_b)
    return tile_b, CHUNK_B, b_pad


def _make_mlp_kernel(chunk_b, num_chunks):
    def kernel(x_ref, w1_ref, b1_ref, w2_ref, b2_ref, o_ref):
        # x_ref : (1, TILE_B)      batch on lanes
        # w1_ref: (HIDDEN, 1)      fc1.weight  (in_features == 1)
        # b1_ref: (HIDDEN, 1)      fc1.bias    (column)
        # w2_ref: (OUT, HIDDEN)    fc2.weight
        # b2_ref: (OUT, 1)         fc2.bias    (column)
        # o_ref : (OUT, TILE_B)    lane-dense output
        # Hoist parameter loads out of the chunk loop (avoid re-broadcasting).
        w1 = w1_ref[...]
        b1 = b1_ref[...]
        w2 = w2_ref[...]
        b2 = b2_ref[...]

        def chunk_body(c, carry):
            start = pl.multiple_of(c * chunk_b, chunk_b)
            xc = x_ref[:, pl.ds(start, chunk_b)]                 # (1, chunk_b)
            # Layer 1 (K=1 contraction) on the VPU: broadcast outer product.
            h = jnp.maximum(w1 * xc + b1, 0.0)                   # (HIDDEN, chunk_b)
            # Layer 2 on the MXU, f32 accumulate; result is lane-dense.
            y = jnp.dot(w2, h, preferred_element_type=jnp.float32) + b2
            o_ref[:, pl.ds(start, chunk_b)] = y.astype(o_ref.dtype)
            return carry

        lax.fori_loop(0, num_chunks, chunk_body, 0,
                      unroll=min(8, num_chunks))

    return kernel


def _net_forward_pallas(x, w1, b1, w2, b2):
    """Pallas path. x: (B, 1). Returns (OUT_FEATURES, B), lane-dense."""
    B = x.shape[0]
    tile_b, chunk_b, b_pad = _choose_tiling(B)
    num_chunks = tile_b // chunk_b
    grid = (b_pad // tile_b,)

    x_t = x.reshape(B)[None, :]                                  # (1, B)
    if b_pad != B:
        x_t = jnp.pad(x_t, ((0, 0), (0, b_pad - B)))

    b1c = b1.reshape(HIDDEN, 1)
    b2c = b2.reshape(OUT_FEATURES, 1)

    flops = (2 * HIDDEN + HIDDEN + 2 * OUT_FEATURES * HIDDEN + OUT_FEATURES) * b_pad
    bytes_accessed = 4 * b_pad * (IN_FEATURES + OUT_FEATURES) + 4 * (
        HIDDEN * IN_FEATURES + HIDDEN + OUT_FEATURES * HIDDEN + OUT_FEATURES)

    y_t = pl.pallas_call(
        _make_mlp_kernel(chunk_b, num_chunks),
        out_shape=jax.ShapeDtypeStruct((OUT_FEATURES, b_pad), jnp.float32),
        grid=grid,
        in_specs=[
            # batch-tiled input, lane-dense
            pl.BlockSpec((1, tile_b), lambda i: (0, i)),
            # weights/biases: constant block index -> VMEM-resident across steps
            pl.BlockSpec((HIDDEN, 1), lambda i: (0, 0)),
            pl.BlockSpec((HIDDEN, 1), lambda i: (0, 0)),
            pl.BlockSpec((OUT_FEATURES, HIDDEN), lambda i: (0, 0)),
            pl.BlockSpec((OUT_FEATURES, 1), lambda i: (0, 0)),
        ],
        out_specs=pl.BlockSpec((OUT_FEATURES, tile_b), lambda i: (0, i)),
        compiler_params=pltpu.CompilerParams(
            dimension_semantics=("parallel",),   # batch axis: megacore-shardable
            vmem_limit_bytes=32 * 1024 * 1024,   # per-step use ~1 MB; v7x-safe limit
        ),
        cost_estimate=pl.CostEstimate(
            flops=flops, transcendentals=0, bytes_accessed=bytes_accessed),
    )(x_t, w1, b1c, w2, b2c)

    return y_t[:, :B]                                            # (3, B)


def net_forward(x, w1, b1, w2, b2, *, use_pallas=None, transpose_output=True):
    """Forward pass of Net.

    x : (B, 1) float32
    w1: (32, 1)  fc1.weight   b1: (32,)  fc1.bias
    w2: (3, 32)  fc2.weight   b2: (3,)   fc2.bias

    transpose_output=True  -> (B, 3)  (PyTorch contract)
    transpose_output=False -> (3, B)  (lane-dense; lets the caller fuse/skip
                                       the final transpose pass over HBM)
    use_pallas=None        -> auto: plain fused XLA below SMALL_BATCH_FALLBACK.
    """
    B = x.shape[0]
    if use_pallas is None:
        use_pallas = B >= SMALL_BATCH_FALLBACK
    if not use_pallas:
        y = jnp.maximum(x @ w1.T + b1, 0.0) @ w2.T + b2          # (B, 3)
        return y if transpose_output else y.T
    y_t = _net_forward_pallas(x, w1, b1, w2, b2)                 # (3, B)
    return y_t.T if transpose_output else y_t


def init_params(key):
    """Deterministic init mimicking PyTorch nn.Linear (uniform +-1/sqrt(fan_in)).

    Layouts match PyTorch: weight (out_features, in_features), bias (out_features,).
    """
    k1, k2, k3, k4 = jax.random.split(key, 4)
    bound1 = 1.0 / jnp.sqrt(IN_FEATURES)
    bound2 = 1.0 / jnp.sqrt(HIDDEN)
    w1 = jax.random.uniform(k1, (HIDDEN, IN_FEATURES), jnp.float32, -bound1, bound1)
    b1 = jax.random.uniform(k2, (HIDDEN,), jnp.float32, -bound1, bound1)
    w2 = jax.random.uniform(k3, (OUT_FEATURES, HIDDEN), jnp.float32, -bound2, bound2)
    b2 = jax.random.uniform(k4, (OUT_FEATURES,), jnp.float32, -bound2, bound2)
    return w1, b1, w2, b2


if __name__ == "__main__":
    key = jax.random.PRNGKey(0)
    pkey, xkey = jax.random.split(key)
    w1, b1, w2, b2 = init_params(pkey)

    # Small deterministic shapes; force the Pallas path so the kernel is
    # exercised (B=8: single tile; B=1536: multi-step grid + padded tail).
    for B in (8, 1536):
        xk = jax.random.fold_in(xkey, B)
        x = jax.random.normal(xk, (B, IN_FEATURES), jnp.float32)

        y = net_forward(x, w1, b1, w2, b2, use_pallas=True)
        y = jax.block_until_ready(y)

        # Reference in plain JAX (same math as the PyTorch module).
        y_ref = jnp.maximum(x @ w1.T + b1, 0.0) @ w2.T + b2
        assert y.shape == (B, OUT_FEATURES)
        assert jnp.allclose(y, y_ref, atol=1e-5, rtol=1e-5), f"mismatch at B={B}"

    print("KERNEL_OK")
</pallas_src>

<mosaic_0001>
module attributes {stable_mosaic.version = 11 : i64} {
  func.func @kernel(%arg0: i32, %arg1: memref<1x128xf32, #tpu.memory_space<vmem>>, %arg2: memref<32x1xf32, #tpu.memory_space<vmem>>, %arg3: memref<32x1xf32, #tpu.memory_space<vmem>>, %arg4: memref<3x32xf32, #tpu.memory_space<vmem>>, %arg5: memref<3x1xf32, #tpu.memory_space<vmem>>, %arg6: memref<3x128xf32, #tpu.memory_space<vmem>>) attributes {dimension_semantics = [#tpu.dimension_semantics<parallel>], iteration_bounds = array<i64: 1>, scalar_prefetch = 0 : i64, scratch_operands = 0 : i64, tpu.core_type = #tpu.core_type<tc>, window_params = [{transform_indices = @transform_0, window_bounds = array<i64: 1, 128>}, {pipeline_mode = #tpu.pipeline_mode<synchronous>, transform_indices = @transform_1, window_bounds = array<i64: 32, 1>}, {pipeline_mode = #tpu.pipeline_mode<synchronous>, transform_indices = @transform_2, window_bounds = array<i64: 32, 1>}, {pipeline_mode = #tpu.pipeline_mode<synchronous>, transform_indices = @transform_3, window_bounds = array<i64: 3, 32>}, {pipeline_mode = #tpu.pipeline_mode<synchronous>, transform_indices = @transform_4, window_bounds = array<i64: 3, 1>}, {transform_indices = @transform_5, window_bounds = array<i64: 3, 128>}]} {
    %c0 = arith.constant 0 : index
    %c0_0 = arith.constant 0 : index
    %0 = vector.load %arg2[%c0, %c0_0] : memref<32x1xf32, #tpu.memory_space<vmem>>, vector<32x1xf32>
    %c0_1 = arith.constant 0 : index
    %c0_2 = arith.constant 0 : index
    %1 = vector.load %arg3[%c0_1, %c0_2] : memref<32x1xf32, #tpu.memory_space<vmem>>, vector<32x1xf32>
    %c0_3 = arith.constant 0 : index
    %c0_4 = arith.constant 0 : index
    %2 = vector.load %arg4[%c0_3, %c0_4] : memref<3x32xf32, #tpu.memory_space<vmem>>, vector<3x32xf32>
    %c0_5 = arith.constant 0 : index
    %c0_6 = arith.constant 0 : index
    %3 = vector.load %arg5[%c0_5, %c0_6] : memref<3x1xf32, #tpu.memory_space<vmem>>, vector<3x1xf32>
    %c0_i32 = arith.constant 0 : i32
    %c128_i32 = arith.constant 128 : i32
    %4 = arith.muli %c0_i32, %c128_i32 : i32
    %5 = tpu.assume_multiple %4, 128 : i32
    %c0_7 = arith.constant 0 : index
    %6 = arith.index_cast %5 : i32 to index
    %7 = vector.load %arg1[%c0_7, %6] : memref<1x128xf32, #tpu.memory_space<vmem>>, vector<1x128xf32>
    %8 = vector.broadcast %0 : vector<32x1xf32> to vector<32x128xf32>
    %9 = vector.broadcast %7 : vector<1x128xf32> to vector<32x128xf32>
    %10 = arith.mulf %8, %9 : vector<32x128xf32>
    %11 = vector.broadcast %1 : vector<32x1xf32> to vector<32x128xf32>
    %12 = arith.addf %10, %11 : vector<32x128xf32>
    %cst = arith.constant 0.000000e+00 : f32
    %13 = vector.broadcast %cst : f32 to vector<32x128xf32>
    %14 = arith.maximumf %12, %13 : vector<32x128xf32>
    %cst_8 = arith.constant dense<0.000000e+00> : vector<3x128xf32>
    %15 = tpu.matmul %2, %14, %cst_8 {dimension_numbers = #tpu.dot_dimension_numbers<[1], [0], [0], [1], [0, 0, 1, 1], [], []>} : vector<3x32xf32>, vector<32x128xf32>, vector<3x128xf32> -> vector<3x128xf32>
    %16 = vector.broadcast %3 : vector<3x1xf32> to vector<3x128xf32>
    %17 = arith.addf %15, %16 : vector<3x128xf32>
    %c0_9 = arith.constant 0 : index
    %18 = arith.index_cast %5 : i32 to index
    %19 = vector.load %arg6[%c0_9, %18] : memref<3x128xf32, #tpu.memory_space<vmem>>, vector<3x128xf32>
    tpu.vector_store %arg6[%c0_9, %18], %17 {strides = array<i32>} : memref<3x128xf32, #tpu.memory_space<vmem>>, vector<3x128xf32>,
    %c1_i32 = arith.constant 1 : i32
    return
  }
  func.func @transform_0(%arg0: i32) -> (i32, i32) {
    %c0_i32 = arith.constant 0 : i32
    %c0_i32_0 = arith.constant 0 : i32
    return %c0_i32, %arg0 : i32, i32
  }
  func.func @transform_1(%arg0: i32) -> (i32, i32) {
    %c0_i32 = arith.constant 0 : i32
    %c0_i32_0 = arith.constant 0 : i32
    %c0_i32_1 = arith.constant 0 : i32
    return %c0_i32, %c0_i32_0 : i32, i32
  }
  func.func @transform_2(%arg0: i32) -> (i32, i32) {
    %c0_i32 = arith.constant 0 : i32
    %c0_i32_0 = arith.constant 0 : i32
    %c0_i32_1 = arith.constant 0 : i32
    return %c0_i32, %c0_i32_0 : i32, i32
  }
  func.func @transform_3(%arg0: i32) -> (i32, i32) {
    %c0_i32 = arith.constant 0 : i32
    %c0_i32_0 = arith.constant 0 : i32
    %c0_i32_1 = arith.constant 0 : i32
    return %c0_i32, %c0_i32_0 : i32, i32
  }
  func.func @transform_4(%arg0: i32) -> (i32, i32) {
    %c0_i32 = arith.constant 0 : i32
    %c0_i32_0 = arith.constant 0 : i32
    %c0_i32_1 = arith.constant 0 : i32
    return %c0_i32, %c0_i32_0 : i32, i32
  }
  func.func @transform_5(%arg0: i32) -> (i32, i32) {
    %c0_i32 = arith.constant 0 : i32
    %c0_i32_0 = arith.constant 0 : i32
    return %c0_i32, %arg0 : i32, i32
  }
}

</mosaic_0001>

<llo_original>
// kernel: tpu_custom_call.1
$region0: #{tpu_custom_call.1}
  #allocation0 [shape = 'u32[]', space=smem, size = 0x4, offset = 0x4, fixed_abs, tag = 'smem constant byte address 0x4 - core index']
  #allocation1 [shape = 'u32[144,128]{1,0:T(1,128)}', space=vmem, size = 0x12000, scoped, tag = 'internal scratch']
  %s0 = inlined_call_operand.vmem [shape: f32[1,128], index: 0, kind: input, shape index: {}]
  %s1 = inlined_call_operand.vmem [shape: f32[32,1], index: 1, kind: input, shape index: {}]
  %s2 = inlined_call_operand.vmem [shape: f32[32,1], index: 2, kind: input, shape index: {}]
  %s3 = inlined_call_operand.vmem [shape: f32[3,32], index: 3, kind: input, shape index: {}]
  %s4 = inlined_call_operand.vmem [shape: f32[3,1], index: 4, kind: input, shape index: {}]
  %s5 = inlined_call_operand.hbm [shape: f32[3,128], index: 5, kind: output, shape index: {}]
  %s6 = sld [smem:[#allocation0]]
  $region30: #{tpu_custom_call.1} parent=0
    _
  %s8 = ssub.s32 1, %s6
  %s9 = scalar_select 0, %s8, %s6
  $region1: #{tpu_custom_call.1} parent=0
    #allocation2 [shape = 'u8[2048]{0}', space=vmem, size = 0x800, scoped, tag = 'output window, operand 0, single buffered']
    #allocation3 [shape = 's32[1]{0}', space=sflag, size = 0x4, scoped, tag = 'scoped memory for tpu_custom_call.1']
    %10 = vsyncpa [#allocation3], 0
    // Predicated region
    $region2: #{tpu_custom_call.1} parent=1 // pred_check
      _
    $region3: #{tpu_custom_call.1} parent=1 // pred_check_branch
      %12 = sbr.rel (0) target = $region5
    $region4: #{tpu_custom_call.1} parent=1 // pred_region
      _
    $region5: #{tpu_custom_call.1} parent=1 // pred_fallthru
      _
    // Predicated region
    $region6: #{tpu_custom_call.1} parent=1 // pred_check
      _
    $region7: #{tpu_custom_call.1} parent=1 // pred_check_branch
      %14 = sbr.rel (0) target = $region9
    $region8: #{tpu_custom_call.1} parent=1 // pred_region
      _
    $region9: #{tpu_custom_call.1} parent=1 // pred_fallthru
      _
    // Predicated region
    $region10: #{tpu_custom_call.1} parent=1 // pred_check
      _
    $region11: #{tpu_custom_call.1} parent=1 // pred_check_branch
      %16 = sbr.rel (0) target = $region13
    $region12: #{tpu_custom_call.1} parent=1 // pred_region
      _
    $region13: #{tpu_custom_call.1} parent=1 // pred_fallthru
      _
    // Predicated region
    $region14: #{tpu_custom_call.1} parent=1 // pred_check
      _
    $region15: #{tpu_custom_call.1} parent=1 // pred_check_branch
      %18 = sbr.rel (0) target = $region17
    $region16: #{tpu_custom_call.1} parent=1 // pred_region
      _
    $region17: #{tpu_custom_call.1} parent=1 // pred_fallthru
      _
    // Predicated region
    $region18: #{tpu_custom_call.1} parent=1 // pred_check
      _
    $region19: #{tpu_custom_call.1} parent=1 // pred_check_branch
      %20 = sbr.rel (0) target = $region21
    $region20: #{tpu_custom_call.1} parent=1 // pred_region
      _
    $region21: #{tpu_custom_call.1} parent=1 // pred_fallthru
      _
    %v21 = vld [vmem:[%s1] sm:$0xff]
    %v22 = vld [vmem:[%s1 + $0x8] sm:$0xff]
    %v23 = vld [vmem:[%s1 + $0x10] sm:$0xff]
    %v24 = vld [vmem:[%s1 + $0x18] sm:$0xff]
    %v25 = vld [vmem:[%s2] sm:$0xff]
    %v26 = vld [vmem:[%s2 + $0x8] sm:$0xff]
    %v27 = vld [vmem:[%s2 + $0x10] sm:$0xff]
    %v28 = vld [vmem:[%s2 + $0x18] sm:$0xff]
    %v29 = vld [vmem:[%s3] sm:$0x7]
    %v30 = vld [vmem:[%s4] sm:$0x7]
    %v31 = vld [vmem:[%s0] sm:$0x1]
    %33 = vset.pattern.permute.xlu0 0
    %34 = vperm.xlu0 %33, %v21
    %v35 = vpop.permute.xlu0 %34
    %38 = vset.pattern.permute.xlu0 0
    %39 = vperm.xlu0 %38, %v22
    %v40 = vpop.permute.xlu0 %39
    %43 = vset.pattern.permute.xlu0 0
    %44 = vperm.xlu0 %43, %v23
    %v45 = vpop.permute.xlu0 %44
    %48 = vset.pattern.permute.xlu0 0
    %49 = vperm.xlu0 %48, %v24
    %v50 = vpop.permute.xlu0 %49
    %v53 = vlaneseq
    %v54 = vshrl.u32 %v53, 7
    %v55 = vsub.s32 0, %v54
    %v56 = vrot.slane %v31, %v55
    %v58 = vmul.f32 %v35, %v56
    %v59 = vmul.f32 %v40, %v56
    %v60 = vmul.f32 %v45, %v56
    %v61 = vmul.f32 %v50, %v56
    %63 = vset.pattern.permute.xlu0 0
    %64 = vperm.xlu0 %63, %v25
    %v65 = vpop.permute.xlu0 %64
    %68 = vset.pattern.permute.xlu0 0
    %69 = vperm.xlu0 %68, %v26
    %v70 = vpop.permute.xlu0 %69
    %73 = vset.pattern.permute.xlu0 0
    %74 = vperm.xlu0 %73, %v27
    %v75 = vpop.permute.xlu0 %74
    %78 = vset.pattern.permute.xlu0 0
    %79 = vperm.xlu0 %78, %v28
    %v80 = vpop.permute.xlu0 %79
    %v82 = vadd.f32 %v58, %v65
    %v83 = vadd.f32 %v59, %v70
    %v84 = vadd.f32 %v60, %v75
    %v85 = vadd.f32 %v61, %v80
    %v86 = vmax.f32 %v82, 0.0
    %v87 = vmax.f32 %v83, 0.0
    %v88 = vmax.f32 %v84, 0.0
    %v89 = vmax.f32 %v85, 0.0
    %91 = vset.pattern.permute.xlu0 0
    %92 = vperm.xlu0 %91, %v30
    %v93 = vpop.permute.xlu0 %92
    %vm95 = vcmask 261120
    %v97 = vsel %vm95, %v29, 0
    %99 = vmatprep.subr.mxu0 0.0
    %100 = vmatpush1.msra.mxu0 0.0
    %101 = vmatprep.subr.mxu0 0.0
    %102 = vmatpush1.msra.mxu0 0.0
    %103 = vmatprep.subr.mxu0 0.0
    %104 = vmatpush1.msra.mxu0 0.0
    %105 = vmatprep.subr.mxu0 0.0
    %106 = vmatpush1.msra.mxu0 0.0
    %107 = vmatprep.subr.mxu0 0.0
    %108 = vmatpush1.msra.mxu0 0.0
    %109 = vmatprep.subr.mxu0 0.0
    %110 = vmatpush1.msra.mxu0 0.0
    %111 = vmatprep.subr.mxu0 0.0
    %112 = vmatpush1.msra.mxu0 0.0
    %113 = vmatprep.subr.mxu0 0.0
    %114 = vmatpush1.msra.mxu0 0.0
    %115 = vmatprep.subr.mxu0 0.0
    %116 = vmatpush1.msra.mxu0 0.0
    %117 = vmatprep.subr.mxu0 0.0
    %118 = vmatpush1.msra.mxu0 0.0
    %119 = vmatprep.subr.mxu0 0.0
    %120 = vmatpush1.msra.mxu0 0.0
    %121 = vmatprep.subr.mxu0 0.0
    %122 = vmatpush1.msra.mxu0 0.0
    %123 = vmatprep.subr.mxu0 0.0
    %124 = vmatpush1.msra.mxu0 %v89
    %125 = vmatprep.subr.mxu0 0.0
    %126 = vmatpush1.msra.mxu0 %v88
    %127 = vmatprep.subr.mxu0 0.0
    %128 = vmatpush1.msra.mxu0 %v87
    %129 = vmatprep.subr.mxu0 0.0
    %130 = vmatpush1.msra.mxu0 %v86
    %131 = vmatprep.subr.mxu0 0.0
    %132 = vmatpush2.msra.mxu0 0.0
    %133 = vmatprep.subr.mxu0 0.0
    %134 = vmatpush2.msra.mxu0 0.0
    %135 = vmatprep.subr.mxu0 0.0
    %136 = vmatpush2.msra.mxu0 0.0
    %137 = vmatprep.subr.mxu0 0.0
    %138 = vmatpush2.msra.mxu0 0.0
    %139 = vmatprep.subr.mxu0 0.0
    %140 = vmatpush2.msra.mxu0 0.0
    %141 = vmatprep.subr.mxu0 0.0
    %142 = vmatpush2.msra.mxu0 0.0
    %143 = vmatprep.subr.mxu0 0.0
    %144 = vmatpush2.msra.mxu0 0.0
    %145 = vmatprep.subr.mxu0 0.0
    %146 = vmatpush2.msra.mxu0 0.0
    %147 = vmatprep.subr.mxu0 0.0
    %148 = vmatpush2.msra.mxu0 0.0
    %149 = vmatprep.subr.mxu0 0.0
    %150 = vmatpush2.msra.mxu0 0.0
    %151 = vmatprep.subr.mxu0 0.0
    %152 = vmatpush2.msra.mxu0 0.0
    %153 = vmatprep.subr.mxu0 0.0
    %154 = vmatpush2.msra.mxu0 0.0
    %155 = vmatprep.subr.mxu0 0.0
    %156 = vmatpush2.msra.mxu0 0.0
    %157 = vmatprep.subr.mxu0 0.0
    %158 = vmatpush2.msra.mxu0 0.0
    %159 = vmatprep.subr.mxu0 0.0
    %160 = vmatpush2.msra.mxu0 0.0
    %161 = vmatprep.subr.mxu0 0.0
    %162 = vmatpush2.msra.mxu0 0.0
    %163 = vmatprep.mubr.f32.mxu0 0.0
    %164 = vmatmul.mubr.f32.gmra.mxu0 %v97
    %v165 = vpop.f32.mrf.mxu0
    %v166 = vadd.f32 %v93, %v165
    %v167 = vpop.f32.mrf.mxu0
    %168 = vdwg.mxu0
    %169 = vst [vmem:[#allocation2] sm:$0x7] %v166
    // Predicated region
    $region22: #{tpu_custom_call.1} parent=1 // pred_check
      _
    $region23: #{tpu_custom_call.1} parent=1 // pred_check_branch
      %171 = sbr.rel (0) target = $region25
    $region24: #{tpu_custom_call.1} parent=1 // pred_region
      %s173 = ssub.s32 64, 64
      %174 = vsyncadd [#allocation3], %s173
      %s176 = sshll.u32 [#allocation2], 4
      %s177 = int_to_ptr.vmem [resolvable:$true] %s176
      %179 = dma.vmem_to_hbm [thread:$0]  %s177, 64, %s5, [#allocation3]
    $region25: #{tpu_custom_call.1} parent=1 // pred_fallthru
      _
    // Predicated region
    $region26: #{tpu_custom_call.1} parent=1 // pred_check
      _
    $region27: #{tpu_custom_call.1} parent=1 // pred_check_branch
      %181 = sbr.rel (0) target = $region29
    $region28: #{tpu_custom_call.1} parent=1 // pred_region
      %182 = dma.done [#allocation3], 64
    $region29: #{tpu_custom_call.1} parent=1 // pred_fallthru
      _
    %183 = vsyncpa [#allocation3], 1

</llo_original>
